<compile_context>
chip_gen: v6e
topology: v6e:2x2x1
jax: 0.10.0
libtpu: 0.0.40
codegen_flags: <defaults>
</compile_context>

<pallas_src>
import jax
import jax.numpy as jnp
from jax import lax
from jax.experimental import pallas as pl
from jax.experimental.pallas import tpu as pltpu

MIN_STD = 0.1


def eq_constraint_kernel(xn_ref, w_ref, act_ref):
    # xn_ref : (C, N)  -- contraction dim C on sublanes, batch N lane-dense
    # w_ref  : (C, 1)
    # act_ref: (1, N)  f32
    w = w_ref[...].astype(jnp.float32)                # (C, 1)
    norm = jnp.max(jnp.abs(w))                        # scalar: max |weight|
    w_n = w * (1.0 / norm)                            # normalized weight (C, 1)
    # (exact divide: the weight is tiny; keeps the 1e-5 tolerance comfortably)

    xn = xn_ref[...].astype(jnp.float32)              # (C, N)
    # F.linear(xn, weight) with one output unit == per-column dot product:
    # broadcast w over the lane axis, reduce over the short sublane axis.
    out = jnp.sum(xn * w_n, axis=0, keepdims=True)    # (1, N), lane-dense

    # Unbiased std (ddof=1) of all N elements, single fused reduction pass:
    #   var = (sum(x^2) - sum(x)^2 / n) / (n - 1)
    n = out.shape[0] * out.shape[1]
    s = jnp.sum(out)
    ss = jnp.sum(out * out)
    var = (ss - s * s / n) / (n - 1)                  # NaN/Inf if n == 1 (matches torch)

    # std = max(sqrt(var), MIN_STD)  <=>  inv_std = min(rsqrt(var), 1/MIN_STD)
    inv_std = jnp.minimum(lax.rsqrt(var), 1.0 / MIN_STD)   # EUP rsqrt

    # gaussian(out, std) = exp(-0.5 * (out * inv_std)^2)
    z = out * inv_std
    act_ref[...] = jnp.exp(-0.5 * z * z)              # EUP exp


def eq_constraint_forward(x, xn, weight):
    """x is unused (kept for signature parity with the PyTorch module)."""
    del x
    N, C = xn.shape
    assert weight.shape == (1, C)
    # Lane-dense layout: put the batch dim on lanes.  The transposes are free
    # layout plumbing in the XLA wrapper; inputs keep their native dtype.
    xn_t = jnp.transpose(xn)       # (C, N)
    w_t = jnp.transpose(weight)    # (C, 1)
    act = pl.pallas_call(
        eq_constraint_kernel,
        out_shape=jax.ShapeDtypeStruct((1, N), jnp.float32),
        in_specs=[
            pl.BlockSpec(memory_space=pltpu.MemorySpace.VMEM),
            pl.BlockSpec(memory_space=pltpu.MemorySpace.VMEM),
        ],
        out_specs=pl.BlockSpec(memory_space=pltpu.MemorySpace.VMEM),
    )(xn_t, w_t)
    # torch .squeeze(): drop the size-1 output-feature dim -> (N,)
    return act[0]


def reference_forward(xn, weight):
    """Pure-JAX reference mirroring the PyTorch forward (for sanity check)."""
    w = weight / jnp.max(jnp.abs(weight))
    out = (xn.astype(jnp.float32) @ w.T.astype(jnp.float32))[:, 0]
    n = out.shape[0]
    std = jnp.sqrt(jnp.sum((out - jnp.mean(out)) ** 2) / (n - 1))
    std = jnp.maximum(std, MIN_STD)
    return jnp.exp(-0.5 * (out / std) ** 2)


if __name__ == "__main__":
    key = jax.random.PRNGKey(0)
    k_w, k_x, k_xn = jax.random.split(key, 3)

    n_coeffs = 8      # len(coeffs)
    batch = 16

    # self.weight = Parameter(Tensor(1, len(coeffs)).uniform_(-1, 1))
    weight = jax.random.uniform(k_w, (1, n_coeffs), jnp.float32, -1.0, 1.0)
    x = jax.random.normal(k_x, (batch, n_coeffs), jnp.float32)    # unused, as in torch
    xn = jax.random.normal(k_xn, (batch, n_coeffs), jnp.float32)

    act = eq_constraint_forward(x, xn, weight)
    act = jax.block_until_ready(act)

    ref = reference_forward(xn, weight)
    assert act.shape == (batch,)
    assert jnp.allclose(act, ref, atol=1e-5, rtol=1e-5), (act, ref)

    print("KERNEL_OK")
</pallas_src>

<mosaic_0001>
module attributes {stable_mosaic.version = 11 : i64} {
  func.func @eq_constraint_kernel(%arg0: memref<8x16xf32, #tpu.memory_space<vmem>>, %arg1: memref<8x1xf32, #tpu.memory_space<vmem>>, %arg2: memref<1x16xf32, #tpu.memory_space<vmem>>) attributes {dimension_semantics = [], scalar_prefetch = 0 : i64, scratch_operands = 0 : i64, tpu.core_type = #tpu.core_type<tc>} {
    %c0 = arith.constant 0 : index
    %c0_0 = arith.constant 0 : index
    %0 = vector.load %arg1[%c0, %c0_0] : memref<8x1xf32, #tpu.memory_space<vmem>>, vector<8x1xf32>
    %1 = math.absf %0 : vector<8x1xf32>
    %2 = vector.shape_cast %1 : vector<8x1xf32> to vector<1x8x1xf32>
    %cst = arith.constant dense<0xFF800000> : vector<1xf32>
    %3 = vector.multi_reduction <maximumf>, %2, %cst [1, 2] : vector<1x8x1xf32> to vector<1xf32>
    %4 = vector.shape_cast %3 : vector<1xf32> to vector<1x1x1xf32>
    %5 = vector.extract %4[0, 0, 0] : f32 from vector<1x1x1xf32>
    %cst_1 = arith.constant 1.000000e+00 : f32
    %6 = arith.divf %cst_1, %5 : f32
    %7 = vector.broadcast %6 : f32 to vector<8x1xf32>
    %8 = arith.mulf %0, %7 : vector<8x1xf32>
    %c0_2 = arith.constant 0 : index
    %c0_3 = arith.constant 0 : index
    %9 = vector.load %arg0[%c0_2, %c0_3] : memref<8x16xf32, #tpu.memory_space<vmem>>, vector<8x16xf32>
    %10 = vector.broadcast %8 : vector<8x1xf32> to vector<8x16xf32>
    %11 = arith.mulf %9, %10 : vector<8x16xf32>
    %cst_4 = arith.constant dense<0.000000e+00> : vector<16xf32>
    %12 = vector.multi_reduction <add>, %11, %cst_4 [0] : vector<8x16xf32> to vector<16xf32>
    %13 = vector.shape_cast %12 : vector<16xf32> to vector<1x16xf32>
    %14 = vector.shape_cast %13 : vector<1x16xf32> to vector<1x1x16xf32>
    %cst_5 = arith.constant dense<0.000000e+00> : vector<1xf32>
    %15 = vector.multi_reduction <add>, %14, %cst_5 [1, 2] : vector<1x1x16xf32> to vector<1xf32>
    %16 = vector.shape_cast %15 : vector<1xf32> to vector<1x1x1xf32>
    %17 = vector.extract %16[0, 0, 0] : f32 from vector<1x1x1xf32>
    %18 = arith.mulf %13, %13 : vector<1x16xf32>
    %19 = vector.shape_cast %18 : vector<1x16xf32> to vector<1x1x16xf32>
    %cst_6 = arith.constant dense<0.000000e+00> : vector<1xf32>
    %20 = vector.multi_reduction <add>, %19, %cst_6 [1, 2] : vector<1x1x16xf32> to vector<1xf32>
    %21 = vector.shape_cast %20 : vector<1xf32> to vector<1x1x1xf32>
    %22 = vector.extract %21[0, 0, 0] : f32 from vector<1x1x1xf32>
    %23 = arith.mulf %17, %17 : f32
    %cst_7 = arith.constant 1.600000e+01 : f32
    %24 = arith.divf %23, %cst_7 : f32
    %25 = arith.subf %22, %24 : f32
    %cst_8 = arith.constant 1.500000e+01 : f32
    %26 = arith.divf %25, %cst_8 : f32
    %27 = math.rsqrt %26 : f32
    %cst_9 = arith.constant 1.000000e+01 : f32
    %28 = arith.minimumf %27, %cst_9 : f32
    %29 = vector.broadcast %28 : f32 to vector<1x16xf32>
    %30 = arith.mulf %13, %29 : vector<1x16xf32>
    %cst_10 = arith.constant -5.000000e-01 : f32
    %31 = vector.broadcast %cst_10 : f32 to vector<1x16xf32>
    %32 = arith.mulf %31, %30 : vector<1x16xf32>
    %33 = arith.mulf %32, %30 : vector<1x16xf32>
    %34 = math.exp %33 : vector<1x16xf32>
    %c0_11 = arith.constant 0 : index
    %c0_12 = arith.constant 0 : index
    %35 = vector.load %arg2[%c0_11, %c0_12] : memref<1x16xf32, #tpu.memory_space<vmem>>, vector<1x16xf32>
    tpu.vector_store %arg2[%c0_11, %c0_12], %34 {strides = array<i32>} : memref<1x16xf32, #tpu.memory_space<vmem>>, vector<1x16xf32>,
    return
  }
}

</mosaic_0001>

<llo_original>
// kernel: tpu_custom_call.1
$region0: #{tpu_custom_call.1}
  #allocation0 [shape = 'u32[]', space=smem, size = 0x4, offset = 0x4, fixed_abs, tag = 'smem constant byte address 0x4 - core index']
  #allocation1 [shape = 'u32[144,128]{1,0:T(1,128)}', space=vmem, size = 0x12000, scoped, tag = 'internal scratch']
  %s0 = inlined_call_operand.vmem [shape: f32[8,16], index: 0, kind: input, shape index: {}]
  %s1 = inlined_call_operand.vmem [shape: f32[8,1], index: 1, kind: input, shape index: {}]
  %s2 = inlined_call_operand.hbm [shape: f32[1,16], index: 2, kind: output, shape index: {}]
  %s3 = sld [smem:[#allocation0]]
  $region18: #{tpu_custom_call.1} parent=0
    _
  %s5 = ssub.s32 1, %s3
  %s6 = scalar_select 0, %s5, %s3
  $region1: #{tpu_custom_call.1} parent=0
    #allocation2 [shape = 'u8[512]{0}', space=vmem, size = 0x400, scoped, tag = 'output window, operand 0, single buffered']
    #allocation3 [shape = 's32[1]{0}', space=sflag, size = 0x4, scoped, tag = 'scoped memory for tpu_custom_call.1']
    %7 = vsyncpa [#allocation3], 0
    // Predicated region
    $region2: #{tpu_custom_call.1} parent=1 // pred_check
      _
    $region3: #{tpu_custom_call.1} parent=1 // pred_check_branch
      %9 = sbr.rel (0) target = $region5
    $region4: #{tpu_custom_call.1} parent=1 // pred_region
      _
    $region5: #{tpu_custom_call.1} parent=1 // pred_fallthru
      _
    // Predicated region
    $region6: #{tpu_custom_call.1} parent=1 // pred_check
      _
    $region7: #{tpu_custom_call.1} parent=1 // pred_check_branch
      %11 = sbr.rel (0) target = $region9
    $region8: #{tpu_custom_call.1} parent=1 // pred_region
      _
    $region9: #{tpu_custom_call.1} parent=1 // pred_fallthru
      _
    %v12 = vld [vmem:[%s1] sm:$0xff]
    %v13 = vand.u32 2147483647, %v12
    %vm14 = vcmask 7168
    %v15 = vsel %vm14, %v13, -inf
    %16 = vmax.xlane.f32.xlu0 %v15
    %v17 = vpop.xlane.xlu0 %16
    %v18 = vrot.slane %v17, 4
    %v19 = vmax.f32 %v17, %v18
    %v20 = vrot.slane %v19, 2
    %v21 = vmax.f32 %v19, %v20
    %v22 = vrot.slane %v21, 1
    %v23 = vmax.f32 %v21, %v22
    %s24 = vtos %v23
    %v25 = vstv %s24
    %v26 = vrcp.pop %v25
    %s27 = vtos %v26
    %v28 = vstv %s27
    %v29 = vmul.f32 %v12, %v28
    %v30 = vld [vmem:[%s0] sm:$0xff]
    %32 = vset.pattern.permute.xlu0 0
    %33 = vperm.xlu0 %32, %v29
    %v34 = vpop.permute.xlu0 %33
    %v36 = vmul.f32 %v30, %v34
    %vm37 = vcmask 130048
    %v38 = vsel %vm37, %v36, 0.0
    %v39 = vrot.slane %v38, 4
    %v40 = vadd.f32 %v38, %v39
    %v41 = vrot.slane %v40, 2
    %v42 = vadd.f32 %v40, %v41
    %v43 = vrot.slane %v42, 1
    %v44 = vadd.f32 %v42, %v43
    %vm45 = vcmask 122880
    %v46 = vsel %vm45, %v44, 0.0
    %47 = vadd.xlane.f32.xlu0 %v46
    %v48 = vpop.xlane.xlu0 %47
    %v49 = vrot.slane %v48, 4
    %v50 = vadd.f32 %v48, %v49
    %v51 = vrot.slane %v50, 2
    %v52 = vadd.f32 %v50, %v51
    %v53 = vrot.slane %v52, 1
    %v54 = vadd.f32 %v52, %v53
    %s55 = vtos %v54
    %v56 = vmul.f32 %v44, %v44
    %v57 = vsel %vm45, %v56, 0.0
    %58 = vadd.xlane.f32.xlu0 %v57
    %v59 = vpop.xlane.xlu0 %58
    %v60 = vrot.slane %v59, 4
    %v61 = vadd.f32 %v59, %v60
    %v62 = vrot.slane %v61, 2
    %v63 = vadd.f32 %v61, %v62
    %v64 = vrot.slane %v63, 1
    %v65 = vadd.f32 %v63, %v64
    %s66 = vtos %v65
    %s67 = smul.f32 %s55, %s55
    %v68 = vrcp.pop 16.0
    %s69 = vtos %v68
    %s70 = smul.f32 %s67, %s69
    %s71 = ssub.f32 %s66, %s70
    %v72 = vrcp.pop 15.0
    %s73 = vtos %v72
    %s74 = smul.f32 %s71, %s73
    %v75 = vstv %s74
    %v76 = vrsqrt.pop %v75
    %s77 = vtos %v76
    %s78 = smin.f32 %s77, 10.0
    %v79 = vstv %s78
    %v80 = vmul.f32 %v44, %v79
    %v81 = vmul.f32 %v80, -0.5
    %v82 = vmul.f32 %v81, %v80
    %v83 = vmul.f32 %v82, 1.442695
    %v84 = vpow.pop %v83
    %85 = vst.msk [vmem:[#allocation2] sm:$0x1] %vm45, %v84
    // Predicated region
    $region10: #{tpu_custom_call.1} parent=1 // pred_check
      _
    $region11: #{tpu_custom_call.1} parent=1 // pred_check_branch
      %87 = sbr.rel (0) target = $region13
    $region12: #{tpu_custom_call.1} parent=1 // pred_region
      %s89 = ssub.s32 16, 16
      %90 = vsyncadd [#allocation3], %s89
      %s92 = sshll.u32 [#allocation2], 4
      %s93 = int_to_ptr.vmem [resolvable:$true] %s92
      %95 = dma.vmem_to_hbm [thread:$0]  %s93, 16, %s2, [#allocation3]
    $region13: #{tpu_custom_call.1} parent=1 // pred_fallthru
      _
    // Predicated region
    $region14: #{tpu_custom_call.1} parent=1 // pred_check
      _
    $region15: #{tpu_custom_call.1} parent=1 // pred_check_branch
      %97 = sbr.rel (0) target = $region17
    $region16: #{tpu_custom_call.1} parent=1 // pred_region
      %98 = dma.done [#allocation3], 16
    $region17: #{tpu_custom_call.1} parent=1 // pred_fallthru
      _
    %99 = vsyncpa [#allocation3], 1

</llo_original>
